<compile_context>
chip_gen: v7x
topology: tpu7x:2x2x1
jax: 0.10.0
libtpu: 0.0.40
codegen_flags: <defaults>
</compile_context>

<pallas_src>
import functools

import jax
import jax.numpy as jnp
from jax.experimental import pallas as pl
from jax.experimental.pallas import tpu as pltpu


# ------------------------------ sizing helpers ------------------------------ #

def _round_up(x, m):
    return (x + m - 1) // m * m


def _vmem_limit_bytes():
    """Generation-aware VMEM limit: ~3/4 of physical per-core VMEM.

    v5e/v6e (128 MiB) -> ~96 MiB, v7x (64 MiB) -> ~48 MiB. Falls back to a
    value that is safe on every generation if the query is unavailable.
    """
    try:
        cap = getattr(pltpu.get_tpu_info(), "vmem_capacity_bytes", None)
        if cap:
            return max(32 << 20, int(cap) * 3 // 4)
    except Exception:
        pass
    return 48 << 20


def _pick_tile_d(B, Din, Dout, vmem_limit):
    """Dout tile for the hypernet Linear, derived from the VMEM budget.

    Accounts for the resident x block plus double-buffered bf16 weight, f32
    bias and f32 output blocks.
    """
    budget = int(vmem_limit * 0.7)
    resident = 2 * B * Din * 4                       # x block (f32), x2 buffers
    per_lane = 2 * (Din * 2 + 4 + B * 4)             # w bf16 + bias f32 + out f32
    avail = budget - resident
    if avail <= 0:
        td = 128
    else:
        td = max(128, (avail // per_lane) // 128 * 128)
    if td >= Dout:
        return Dout                                   # full extent: always legal
    return td                                         # multiple of 128


def _pick_conv_tiling(B, CKK, Cout_p, P_pad, vmem_limit):
    """Choose (Nb samples per grid step, P tile) within the VMEM budget.

    Budget includes the double-buffered weight (f32) and bias blocks, not just
    the patches / output streams.
    """
    budget = int(vmem_limit * 0.7)
    divisors = [d for d in range(1, B + 1) if B % d == 0]

    # Group batch samples when the per-sample dot is tiny (<~1 MiB of traffic).
    per_sample_work = CKK * P_pad * 2 + Cout_p * P_pad * 4
    want_nb = max(1, min(16, (1 << 20) // max(per_sample_work, 1)))
    nb_candidates = sorted([d for d in divisors if d <= want_nb], reverse=True)
    if not nb_candidates:
        nb_candidates = [1]

    for nb in nb_candidates:
        resident = 2 * nb * Cout_p * CKK * 4 + 2 * nb * Cout_p * 4   # weights + bias
        per_lane = 2 * nb * (CKK * 2 + Cout_p * 4)                   # patches bf16 + out f32
        avail = budget - resident
        if avail <= 0:
            continue
        tp = (avail // per_lane) // 128 * 128
        if tp >= P_pad:
            return nb, P_pad
        if tp >= 128:
            return nb, tp
    return 1, min(P_pad, 128)


# ----------------------------- Pallas kernels ------------------------------ #

def _linear_kernel(x_ref, w_ref, b_ref, o_ref):
    # y = x @ w + b for one Dout tile (lane-dense output).
    # x is cast to bf16 in-kernel (tiny, resident); w streams as bf16 from HBM;
    # accumulation and bias add stay f32.
    x = x_ref[...].astype(jnp.bfloat16)
    o_ref[...] = (
        jnp.dot(x, w_ref[...], preferred_element_type=jnp.float32) + b_ref[...]
    ).astype(o_ref.dtype)


def pallas_linear(x, w_t, b):
    """x: (B, Din) f32, w_t: (Din, Dout) bf16, b: (1, Dout) f32 -> (B, Dout) f32.

    Tiled over Dout (lane-dense output blocks); tile size derived from VMEM.
    """
    B, Din = x.shape
    Dout = w_t.shape[1]
    vmem_limit = _vmem_limit_bytes()
    td = _pick_tile_d(B, Din, Dout, vmem_limit)
    grid = (pl.cdiv(Dout, td),)

    flops = 2 * B * Din * Dout
    bytes_accessed = 4 * B * Din + 2 * Din * Dout + 4 * Dout + 4 * B * Dout

    return pl.pallas_call(
        _linear_kernel,
        out_shape=jax.ShapeDtypeStruct((B, Dout), jnp.float32),
        grid=grid,
        in_specs=[
            pl.BlockSpec((B, Din), lambda d: (0, 0)),    # tiny; stays resident
            pl.BlockSpec((Din, td), lambda d: (0, d)),   # bf16 weight stream
            pl.BlockSpec((1, td), lambda d: (0, d)),
        ],
        out_specs=pl.BlockSpec((B, td), lambda d: (0, d)),
        compiler_params=pltpu.CompilerParams(
            dimension_semantics=("parallel",),
            vmem_limit_bytes=vmem_limit,
        ),
        cost_estimate=pl.CostEstimate(
            flops=int(flops), transcendentals=0, bytes_accessed=int(bytes_accessed)),
    )(x, w_t, b)


def _batch_conv_kernel(w_ref, p_ref, b_ref, o_ref, *, nb):
    # One (batch-group, P-tile) grid step. For each of the nb samples:
    #   (Cout_p, CKK) f32 -> bf16  @  (CKK, TILE_P) bf16  ->  (Cout_p, TILE_P) f32
    # bias add stays f32. The weight/bias blocks are constant along the P grid
    # axis so they stay resident in VMEM; the in-kernel bf16 cast is ~free.
    for n in range(nb):
        w = w_ref[n].astype(jnp.bfloat16)
        acc = jnp.dot(w, p_ref[n], preferred_element_type=jnp.float32)
        o_ref[n] = (acc + b_ref[n]).astype(o_ref.dtype)


def pallas_batch_conv_matmul(kernel_mat, patches, bias, out_dtype=jnp.float32):
    """kernel_mat: (B, Cout, CKK) f32, patches: (B, CKK, P) bf16, bias: (B, Cout) f32.

    Returns (B, Cout, P) in `out_dtype` (lane-dense along P, reshapes directly
    to NCHW). Cout is padded to a multiple of 8 and P to a multiple of 128
    internally so output stores are unmasked; padding is sliced off here.
    """
    B, Cout, CKK = kernel_mat.shape
    P = patches.shape[-1]

    Cout_p = _round_up(Cout, 8)
    P_pad = _round_up(P, 128)
    if Cout_p != Cout:
        kernel_mat = jnp.pad(kernel_mat, ((0, 0), (0, Cout_p - Cout), (0, 0)))
        bias = jnp.pad(bias, ((0, 0), (0, Cout_p - Cout)))
    if P_pad != P:
        patches = jnp.pad(patches, ((0, 0), (0, 0), (0, P_pad - P)))
    bias3 = bias.reshape(B, Cout_p, 1)

    vmem_limit = _vmem_limit_bytes()
    nb, tp = _pick_conv_tiling(B, CKK, Cout_p, P_pad, vmem_limit)
    grid = (B // nb, pl.cdiv(P_pad, tp))   # P axis fastest -> weights stay resident

    flops = 2 * B * Cout_p * CKK * P_pad
    bytes_accessed = (4 * B * Cout_p * CKK      # f32 per-sample weights
                      + 2 * B * CKK * P_pad     # bf16 patches
                      + 4 * B * Cout_p          # f32 bias
                      + 4 * B * Cout_p * P_pad) # output

    out = pl.pallas_call(
        functools.partial(_batch_conv_kernel, nb=nb),
        out_shape=jax.ShapeDtypeStruct((B, Cout_p, P_pad), out_dtype),
        grid=grid,
        in_specs=[
            # Per-sample weights / bias: constant along P axis -> resident in VMEM.
            pl.BlockSpec((nb, Cout_p, CKK), lambda g, p: (g, 0, 0)),
            pl.BlockSpec((nb, CKK, tp), lambda g, p: (g, 0, p)),
            pl.BlockSpec((nb, Cout_p, 1), lambda g, p: (g, 0, 0)),
        ],
        out_specs=pl.BlockSpec((nb, Cout_p, tp), lambda g, p: (g, 0, p)),
        compiler_params=pltpu.CompilerParams(
            # No accumulator along P -> both axes are parallel (lets v7x shard
            # either axis across its 2 TensorCores, also fine on v5e/v6e).
            dimension_semantics=("parallel", "parallel"),
            vmem_limit_bytes=vmem_limit,
        ),
        cost_estimate=pl.CostEstimate(
            flops=int(flops), transcendentals=0, bytes_accessed=int(bytes_accessed)),
    )(kernel_mat, patches, bias3)

    return out[:, :Cout, :P]


# ------------------------------- JAX glue ---------------------------------- #

def _im2col(x, k, stride, padding, dilation):
    """x: (B, C, H, W) -> patches (B, C*k*k, H_out*W_out); CKK in (c, ki, kj) order.

    P is the last (lane) dimension — no final transpose needed. Runs in the
    input dtype (call with bf16 x so patches are built directly in bf16).
    """
    B, C, H, W = x.shape
    xp = jnp.pad(x, ((0, 0), (0, 0), (padding, padding), (padding, padding)))
    Hp, Wp = H + 2 * padding, W + 2 * padding
    H_out = (Hp - dilation * (k - 1) - 1) // stride + 1
    W_out = (Wp - dilation * (k - 1) - 1) // stride + 1
    cols = []
    for ki in range(k):
        for kj in range(k):
            sl = xp[:, :,
                    ki * dilation: ki * dilation + stride * (H_out - 1) + 1: stride,
                    kj * dilation: kj * dilation + stride * (W_out - 1) + 1: stride]
            cols.append(sl)                        # (B, C, H_out, W_out)
    patches = jnp.stack(cols, axis=2)              # (B, C, k*k, H_out, W_out)
    patches = patches.reshape(B, C * k * k, H_out * W_out)   # (B, CKK, P)
    return patches, H_out, W_out


class BatchConv2dPallas:
    """Per-sample conv with hypernetwork-generated weights (mirrors BatchConv2d)."""

    def __init__(self, in_channels, out_channels, hyp_out_units,
                 stride=1, padding=0, dilation=1, kernel_size=3, key=None):
        self.stride = stride
        self.padding = padding
        self.dilation = dilation
        self.kernel_size = kernel_size
        self.in_channels = in_channels
        self.out_channels = out_channels

        kernel_units = out_channels * in_channels * kernel_size * kernel_size
        bias_units = out_channels

        if key is None:
            key = jax.random.PRNGKey(0)
        k1, k2, k3, k4 = jax.random.split(key, 4)
        bound = 1.0 / (hyp_out_units ** 0.5)
        Wk = jax.random.uniform(k1, (kernel_units, hyp_out_units),
                                jnp.float32, -bound, bound)
        Wb = jax.random.uniform(k3, (bias_units, hyp_out_units),
                                jnp.float32, -bound, bound)
        # Stored pre-transposed (matmul-ready) and in bf16: the hypernet Linears
        # are weight-streaming memory-bound, so bf16 halves their HBM bytes
        # (f32 accumulation is kept inside the kernel). Row order of Wk already
        # matches torch's (Cout, Cin, k, k) flattening, so the generated kernel
        # reshapes directly to (B, Cout, CKK) with no per-call transpose.
        self.Wk_t = Wk.T.astype(jnp.bfloat16)              # (hyp, Cout*Cin*k*k)
        self.Wb_t = Wb.T.astype(jnp.bfloat16)              # (hyp, Cout)
        self.bk = jax.random.uniform(k2, (kernel_units,), jnp.float32, -bound, bound)
        self.bb = jax.random.uniform(k4, (bias_units,), jnp.float32, -bound, bound)

    def __call__(self, x, hyp_out, include_bias=True):
        assert x.shape[0] == hyp_out.shape[0]
        B = x.shape[0]
        k = self.kernel_size
        Cin, Cout = self.in_channels, self.out_channels
        CKK = Cin * k * k

        # Hypernet linear layers (tiled Pallas matmuls, bf16 weight streaming).
        kernel_flat = pallas_linear(hyp_out, self.Wk_t, self.bk[None, :])  # (B, Cout*CKK) f32
        if include_bias:
            bias = pallas_linear(hyp_out, self.Wb_t, self.bb[None, :])     # (B, Cout) f32
        else:
            bias = jnp.zeros((B, Cout), jnp.float32)

        kernel_mat = kernel_flat.reshape(B, Cout, CKK)                     # no transpose

        # Interim (until im2col is fused into the conv kernel): build patches
        # directly in bf16 so the inflated stream is half-width and there is no
        # separate astype pass over it.
        patches, H_out, W_out = _im2col(
            x.astype(jnp.bfloat16), k, self.stride, self.padding, self.dilation)

        out = pallas_batch_conv_matmul(kernel_mat, patches, bias)          # (B, Cout, P) f32
        out = out.reshape(B, Cout, H_out, W_out)                           # NCHW, no transpose
        return out, kernel_flat, bias


def _reference(x, hyp_out, mod, include_bias=True):
    """Pure-JAX f32 reference (lax conv), mirrors the PyTorch forward."""
    B = x.shape[0]
    k, Cin, Cout = mod.kernel_size, mod.in_channels, mod.out_channels
    kflat = hyp_out @ mod.Wk_t.astype(jnp.float32) + mod.bk
    w = kflat.reshape(B, Cout, Cin, k, k)

    def conv1(xi, wi):
        return jax.lax.conv_general_dilated(
            xi[None], wi, window_strides=(mod.stride, mod.stride),
            padding=[(mod.padding, mod.padding)] * 2,
            rhs_dilation=(mod.dilation, mod.dilation),
            dimension_numbers=("NCHW", "OIHW", "NCHW"))[0]

    out = jax.vmap(conv1)(x, w)
    if include_bias:
        bias = hyp_out @ mod.Wb_t.astype(jnp.float32) + mod.bb
        out = out + bias[:, :, None, None]
    return out


if __name__ == "__main__":
    B, Cin, Cout, H, W = 2, 4, 4, 16, 16
    hyp_units = 32

    key = jax.random.PRNGKey(0)
    kx, kh, kp = jax.random.split(key, 3)
    x = jax.random.normal(kx, (B, Cin, H, W), jnp.float32)
    hyp_out = jax.random.normal(kh, (B, hyp_units), jnp.float32)

    mod = BatchConv2dPallas(Cin, Cout, hyp_units, stride=1, padding=0,
                            dilation=1, kernel_size=3, key=kp)

    out, _, _ = mod(x, hyp_out, include_bias=True)
    out = jax.block_until_ready(out)

    ref = jax.block_until_ready(_reference(x, hyp_out, mod, include_bias=True))

    assert out.shape == (B, Cout, H - 2, W - 2), out.shape
    # bf16 MXU operands with f32 accumulation -> loosened tolerance vs f32 reference.
    assert jnp.allclose(out, ref, atol=2e-1, rtol=5e-2), float(
        jnp.max(jnp.abs(out - ref)))

    print("KERNEL_OK")
</pallas_src>

<mosaic_0001>
module attributes {stable_mosaic.version = 11 : i64} {
  func.func @_linear_kernel(%arg0: i32, %arg1: memref<2x32xf32, #tpu.memory_space<vmem>>, %arg2: memref<32x144xbf16, #tpu.memory_space<vmem>>, %arg3: memref<1x144xf32, #tpu.memory_space<vmem>>, %arg4: memref<2x144xf32, #tpu.memory_space<vmem>>) attributes {dimension_semantics = [#tpu.dimension_semantics<parallel>], iteration_bounds = array<i64: 1>, scalar_prefetch = 0 : i64, scratch_operands = 0 : i64, tpu.core_type = #tpu.core_type<tc>, window_params = [{pipeline_mode = #tpu.pipeline_mode<synchronous>, transform_indices = @transform_0, window_bounds = array<i64: 2, 32>}, {transform_indices = @transform_1, window_bounds = array<i64: 32, 144>}, {transform_indices = @transform_2, window_bounds = array<i64: 1, 144>}, {transform_indices = @transform_3, window_bounds = array<i64: 2, 144>}]} {
    %c0 = arith.constant 0 : index
    %c0_0 = arith.constant 0 : index
    %0 = vector.load %arg1[%c0, %c0_0] : memref<2x32xf32, #tpu.memory_space<vmem>>, vector<2x32xf32>
    %1 = arith.truncf %0 : vector<2x32xf32> to vector<2x32xbf16>
    %c0_1 = arith.constant 0 : index
    %c0_2 = arith.constant 0 : index
    %2 = vector.load %arg2[%c0_1, %c0_2] : memref<32x144xbf16, #tpu.memory_space<vmem>>, vector<32x144xbf16>
    %cst = arith.constant dense<0.000000e+00> : vector<2x144xf32>
    %3 = tpu.matmul %1, %2, %cst {dimension_numbers = #tpu.dot_dimension_numbers<[1], [0], [0], [1], [0, 0, 1, 1], [], []>} : vector<2x32xbf16>, vector<32x144xbf16>, vector<2x144xf32> -> vector<2x144xf32>
    %c0_3 = arith.constant 0 : index
    %c0_4 = arith.constant 0 : index
    %4 = vector.load %arg3[%c0_3, %c0_4] : memref<1x144xf32, #tpu.memory_space<vmem>>, vector<1x144xf32>
    %5 = vector.broadcast %4 : vector<1x144xf32> to vector<2x144xf32>
    %6 = arith.addf %3, %5 : vector<2x144xf32>
    %c0_5 = arith.constant 0 : index
    %c0_6 = arith.constant 0 : index
    %7 = vector.load %arg4[%c0_5, %c0_6] : memref<2x144xf32, #tpu.memory_space<vmem>>, vector<2x144xf32>
    tpu.vector_store %arg4[%c0_5, %c0_6], %6 {strides = array<i32>} : memref<2x144xf32, #tpu.memory_space<vmem>>, vector<2x144xf32>,
    return
  }
  func.func @transform_0(%arg0: i32) -> (i32, i32) {
    %c0_i32 = arith.constant 0 : i32
    %c0_i32_0 = arith.constant 0 : i32
    %c0_i32_1 = arith.constant 0 : i32
    return %c0_i32, %c0_i32_0 : i32, i32
  }
  func.func @transform_1(%arg0: i32) -> (i32, i32) {
    %c0_i32 = arith.constant 0 : i32
    %c0_i32_0 = arith.constant 0 : i32
    return %c0_i32, %arg0 : i32, i32
  }
  func.func @transform_2(%arg0: i32) -> (i32, i32) {
    %c0_i32 = arith.constant 0 : i32
    %c0_i32_0 = arith.constant 0 : i32
    return %c0_i32, %arg0 : i32, i32
  }
  func.func @transform_3(%arg0: i32) -> (i32, i32) {
    %c0_i32 = arith.constant 0 : i32
    %c0_i32_0 = arith.constant 0 : i32
    return %c0_i32, %arg0 : i32, i32
  }
}

</mosaic_0001>

<llo_original>
// kernel: tpu_custom_call.1
$region0: #{tpu_custom_call.1}
  #allocation0 [shape = 'u32[]', space=smem, size = 0x4, offset = 0x4, fixed_abs, tag = 'smem constant byte address 0x4 - core index']
  #allocation1 [shape = 'u32[144,128]{1,0:T(1,128)}', space=vmem, size = 0x12000, scoped, tag = 'internal scratch']
  %s0 = inlined_call_operand.hbm [shape: f32[2,32], index: 0, kind: input, shape index: {}]
  %s1 = inlined_call_operand.hbm [shape: bf16[32,144], index: 1, kind: input, shape index: {}]
  %s2 = inlined_call_operand.vmem [shape: f32[1,144], index: 2, kind: input, shape index: {}]
  %s3 = inlined_call_operand.hbm [shape: f32[2,144], index: 3, kind: output, shape index: {}]
  %s4 = sld [smem:[#allocation0]]
  $region30: #{tpu_custom_call.1} parent=0
    _
  %s6 = ssub.s32 1, %s4
  %s7 = scalar_select 0, %s6, %s4
  $region1: #{tpu_custom_call.1} parent=0
    #allocation2 [shape = 'u8[1024]{0}', space=vmem, size = 0x400, scoped, tag = 'input window, operand 0, single buffered']
    #allocation3 [shape = 's32[1]{0}', space=sflag, size = 0x4, scoped, tag = 'scoped memory for tpu_custom_call.1']
    #allocation4 [shape = 's32[1]{0}', space=sflag, size = 0x4, scoped, tag = 'scoped memory for tpu_custom_call.1']
    #allocation5 [shape = 'u8[16384]{0}', space=vmem, size = 0x4000, scoped, tag = 'input window, operand 1, single buffered']
    #allocation6 [shape = 's32[1]{0}', space=sflag, size = 0x4, scoped, tag = 'scoped memory for tpu_custom_call.1']
    #allocation7 [shape = 'u8[2048]{0}', space=vmem, size = 0x800, scoped, tag = 'output window, operand 0, single buffered']
    %8 = vsyncpa [#allocation3], 0
    %9 = vsyncpa [#allocation6], 0
    %10 = vsyncpa [#allocation4], 0
    // Predicated region
    $region2: #{tpu_custom_call.1} parent=1 // pred_check
      _
    $region3: #{tpu_custom_call.1} parent=1 // pred_check_branch
      %12 = sbr.rel (0) target = $region5
    $region4: #{tpu_custom_call.1} parent=1 // pred_region
      %s14 = ssub.s32 32, 32
      %15 = vsyncadd [#allocation3], %s14
      %s17 = sshll.u32 [#allocation2], 4
      %s18 = int_to_ptr.vmem [resolvable:$true] %s17
      %20 = dma.hbm_to_vmem [thread:$0]  %s0, 32, %s18, [#allocation3]
    $region5: #{tpu_custom_call.1} parent=1 // pred_fallthru
      _
    // Predicated region
    $region6: #{tpu_custom_call.1} parent=1 // pred_check
      _
    $region7: #{tpu_custom_call.1} parent=1 // pred_check_branch
      %22 = sbr.rel (0) target = $region9
    $region8: #{tpu_custom_call.1} parent=1 // pred_region
      %s24 = ssub.s32 512, 512
      %25 = vsyncadd [#allocation6], %s24
      %s26 = sshll.u32 [#allocation5], 4
      %s27 = int_to_ptr.vmem [resolvable:$true] %s26
      %32 = dma.hbm_to_vmem [thread:$0]  %s1, 512, %s27, [#allocation6], 128, 128, 8
    $region9: #{tpu_custom_call.1} parent=1 // pred_fallthru
      _
    // Predicated region
    $region10: #{tpu_custom_call.1} parent=1 // pred_check
      _
    $region11: #{tpu_custom_call.1} parent=1 // pred_check_branch
      %34 = sbr.rel (0) target = $region13
    $region12: #{tpu_custom_call.1} parent=1 // pred_region
      _
    $region13: #{tpu_custom_call.1} parent=1 // pred_fallthru
      _
    // Predicated region
    $region14: #{tpu_custom_call.1} parent=1 // pred_check
      _
    $region15: #{tpu_custom_call.1} parent=1 // pred_check_branch
      %36 = sbr.rel (0) target = $region17
    $region16: #{tpu_custom_call.1} parent=1 // pred_region
      %37 = dma.done [#allocation3], 32
    $region17: #{tpu_custom_call.1} parent=1 // pred_fallthru
      _
    // Predicated region
    $region18: #{tpu_custom_call.1} parent=1 // pred_check
      _
    $region19: #{tpu_custom_call.1} parent=1 // pred_check_branch
      %39 = sbr.rel (0) target = $region21
    $region20: #{tpu_custom_call.1} parent=1 // pred_region
      %40 = dma.done [#allocation6], 512
    $region21: #{tpu_custom_call.1} parent=1 // pred_fallthru
      _
    %v42 = vld [vmem:[#allocation2] sm:$0x3]
    %v43 = vpack.c.bf16 %v42, %v42
    %v44 = vld [vmem:[#allocation5] sm:$0xff]
    %v45 = vld [vmem:[#allocation5 + $0x8] sm:$0xff]
    %v46 = vld [vmem:[#allocation5 + $0x10] sm:$0xff]
    %v47 = vld [vmem:[#allocation5 + $0x18] sm:$0xff]
    %v48 = vld [vmem:[%s2] sm:$0x3]
    %v50 = vlaneseq
    %v51 = vshrl.u32 %v50, 7
    %v52 = vsub.s32 0, %v51
    %v53 = vrot.slane %v48, %v52
    %v54 = vlaneseq
    %v55 = vshrl.u32 %v54, 7
    %v56 = vsub.s32 1, %v55
    %v57 = vrot.slane %v48, %v56
    %v64 = vunpack.c.l.b16 %v44
    %v65 = vunpack.c.h.b16 %v44
    %v66 = vunpack.c.l.b16 %v45
    %v67 = vunpack.c.h.b16 %v45
    %v68 = vunpack.c.l.b16 %v46
    %v69 = vunpack.c.h.b16 %v46
    %v70 = vunpack.c.l.b16 %v47
    %v71 = vunpack.c.h.b16 %v47
    %v72 = vpack.c.b16 %v66, %v64
    %v73 = vpack.c.b16 %v67, %v65
    %v74 = vpack.c.b16 %v70, %v68
    %v75 = vpack.c.b16 %v71, %v69
    %vm80 = vcmask 261120
    %v82 = vsel %vm80, %v43, 0
    %84 = vmatprep.subr.bf16.mxu0 %v73
    %85 = vmatpush1.bf16.msra.mxu0 %v72
    %86 = vmatprep.subr.bf16.mxu0 %v75
    %87 = vmatpush1.bf16.msra.mxu0 %v74
    %88 = vmatprep.subr.bf16.mxu0 0
    %89 = vmatpush1.bf16.msra.mxu0 0
    %90 = vmatprep.subr.bf16.mxu0 0
    %91 = vmatpush1.bf16.msra.mxu0 0
    %92 = vmatprep.subr.bf16.mxu0 0
    %93 = vmatpush1.bf16.msra.mxu0 0
    %94 = vmatprep.subr.bf16.mxu0 0
    %95 = vmatpush1.bf16.msra.mxu0 0
    %96 = vmatprep.subr.bf16.mxu0 0
    %97 = vmatpush1.bf16.msra.mxu0 0
    %98 = vmatprep.subr.bf16.mxu0 0
    %99 = vmatpush1.bf16.msra.mxu0 0
    %100 = vmatprep.subr.bf16.mxu0 0
    %101 = vmatpush1.bf16.msra.mxu0 0
    %102 = vmatprep.subr.bf16.mxu0 0
    %103 = vmatpush1.bf16.msra.mxu0 0
    %104 = vmatprep.subr.bf16.mxu0 0
    %105 = vmatpush1.bf16.msra.mxu0 0
    %106 = vmatprep.subr.bf16.mxu0 0
    %107 = vmatpush1.bf16.msra.mxu0 0
    %108 = vmatprep.subr.bf16.mxu0 0
    %109 = vmatpush1.bf16.msra.mxu0 0
    %110 = vmatprep.subr.bf16.mxu0 0
    %111 = vmatpush1.bf16.msra.mxu0 0
    %112 = vmatprep.subr.bf16.mxu0 0
    %113 = vmatpush1.bf16.msra.mxu0 0
    %114 = vmatprep.subr.bf16.mxu0 0
    %115 = vmatpush1.bf16.msra.mxu0 0
    %116 = vmatprep.mubr.bf16.mxu0 0
    %117 = vmatmul.mubr.bf16.gmra.mrb[0].mxu0 %v82
    %v118 = vpop.f32.mrb[0].mxu0
    %v119 = vadd.f32 %v53, %v118
    %v120 = vpop.f32.mrb[0].mxu0
    %v121 = vadd.f32 %v57, %v120
    %v122 = vpop.f32.mrb[0].mxu0
    %v123 = vpop.f32.mrb[0].mxu0
    %124 = vdwg.mxu0
    %v127 = vcombine.low %v119, %v121
    %v129 = vunpack.c.l.s4 1983009808
    %v130 = vunpack.c.0.s8 %v129
    %v131 = vlaneseq
    %v132 = vshrl.u32 %v131, 7
    %v133 = vsub.s32 %v130, %v132
    %v134 = vrot.slane %v127, %v133
    %vm136 = vcmask 1041408
    %vm137 = vcmask 125954
    %vm138 = vmor %vm137, %vm136
    %139 = vst.msk [vmem:[#allocation7] sm:$0xf] %vm138, %v134
    // Predicated region
    $region22: #{tpu_custom_call.1} parent=1 // pred_check
      _
    $region23: #{tpu_custom_call.1} parent=1 // pred_check_branch
      %141 = sbr.rel (0) target = $region25
    $region24: #{tpu_custom_call.1} parent=1 // pred_region
      %s143 = ssub.s32 64, 64
      %144 = vsyncadd [#allocation4], %s143
      %s146 = sshll.u32 [#allocation7], 4
      %s147 = int_to_ptr.vmem [resolvable:$true] %s146
      %149 = dma.vmem_to_hbm [thread:$0]  %s147, 64, %s3, [#allocation4]
    $region25: #{tpu_custom_call.1} parent=1 // pred_fallthru
      _
    // Predicated region
    $region26: #{tpu_custom_call.1} parent=1 // pred_check
      _
    $region27: #{tpu_custom_call.1} parent=1 // pred_check_branch
      %151 = sbr.rel (0) target = $region29
    $region28: #{tpu_custom_call.1} parent=1 // pred_region
      %152 = dma.done [#allocation4], 64
    $region29: #{tpu_custom_call.1} parent=1 // pred_fallthru
      _
    %153 = vsyncpa [#allocation3], 1
    %154 = vsyncpa [#allocation6], 1
    %155 = vsyncpa [#allocation4], 1

</llo_original>
